<compile_context>
chip_gen: v7x
topology: tpu7x:2x2x1
jax: 0.10.0
libtpu: 0.0.40
codegen_flags: <defaults>
</compile_context>

<pallas_src>
import functools
import math

import jax
import jax.numpy as jnp
from jax.experimental import pallas as pl
from jax.experimental.pallas import tpu as pltpu


def _round_up(x: int, m: int) -> int:
    return ((x + m - 1) // m) * m


def _reduce_rows_kernel(x_ref, o_ref, *, reduction, inv_k, lane_dense_out):
    x = x_ref[...]                                        # (tile_rows, K)
    if reduction == "max":
        r = jnp.max(x, axis=-1)                           # (tile_rows,)
    else:  # "mean": f32 accumulate + one compile-time 1/K multiply
        r = jnp.sum(x.astype(jnp.float32), axis=-1) * inv_k
    if lane_dense_out:
        # Lane-dense (1, tile_rows) slab -> unmasked vst for 128-multiples.
        o_ref[...] = r[None, :].astype(o_ref.dtype)
    else:
        # keepdims (tile_rows, 1) fallback (huge-K path); output bytes ~ 1/K
        # of input bytes, so the masked store is negligible.
        o_ref[...] = r[:, None].astype(o_ref.dtype)


def _choose_tile_rows(n_rows: int, n_cols: int, itemsize: int) -> int:
    """Pick a row tile targeting ~8 MiB per (lane-padded) input buffer."""
    padded_cols = _round_up(n_cols, 128)                  # real VMEM width
    bytes_per_row = max(1, padded_cols * itemsize)
    target_rows = (8 << 20) // bytes_per_row              # ~8 MiB / buffer

    if target_rows >= n_rows:
        rows = n_rows
        # v7x megacore: keep >= 2 grid steps so both TensorCores get work.
        if n_rows >= 256:
            rows = min(n_rows, _round_up(pl.cdiv(n_rows, 2), 128))
        return rows

    rows = max(8, target_rows)
    if rows >= 128:
        rows = (rows // 128) * 128                        # lane-dense output
    else:
        rows = (rows // 8) * 8                            # huge-K fallback
        # TODO(synk): if even 8 rows x padded K overflow VMEM, add a second
        # ("arbitrary") grid axis over K with a running max / f32-sum
        # accumulator; unnecessary for image-sized inputs.
    return max(8, min(rows, n_rows))


def feature_extractor(x, n_dims: int, reduction: str = "max"):
    """Pallas equivalent of FeatureExtractor(n_dims, reduction)(x)."""
    if reduction not in ("max", "mean"):
        raise ValueError(
            f"'reduction' must be either 'max' or 'mean', not '{reduction}'"
        )
    if not 1 <= n_dims <= x.ndim:
        raise ValueError("n_dims must be in [1, x.ndim]")
    if reduction == "mean" and not jnp.issubdtype(x.dtype, jnp.floating):
        raise ValueError("mean reduction requires a floating-point input dtype")

    lead_shape = x.shape[:-n_dims]
    n_rows = max(1, math.prod(lead_shape))
    n_cols = math.prod(x.shape[-n_dims:])

    # Wrapper-side flatten: free bitcast (contiguous trailing dims), keeps the
    # reduce lane-dense inside the kernel.
    x2 = x.reshape(n_rows, n_cols)
    itemsize = x2.dtype.itemsize

    tile_rows = _choose_tile_rows(n_rows, n_cols, itemsize)
    grid = (pl.cdiv(n_rows, tile_rows),)
    lane_dense_out = (tile_rows % 128 == 0) or (tile_rows == n_rows)

    # VMEM budget: 2x double-buffered padded input tile + output + margin.
    padded_cols = _round_up(n_cols, 128)
    in_tile_bytes = _round_up(tile_rows, 32) * padded_cols * itemsize
    out_tile_bytes = 8 * _round_up(max(tile_rows, 128), 128) * 4
    vmem_limit = 2 * (in_tile_bytes + out_tile_bytes) + (4 << 20)
    vmem_limit = int(min(max(vmem_limit, 32 << 20), 48 << 20))

    kernel = functools.partial(
        _reduce_rows_kernel,
        reduction=reduction,
        inv_k=1.0 / n_cols,
        lane_dense_out=lane_dense_out,
    )

    if lane_dense_out:
        out_shape = jax.ShapeDtypeStruct((1, n_rows), x.dtype)
        out_spec = pl.BlockSpec((1, tile_rows), lambda i: (0, i))
    else:
        out_shape = jax.ShapeDtypeStruct((n_rows, 1), x.dtype)
        out_spec = pl.BlockSpec((tile_rows, 1), lambda i: (i, 0))

    cost = pl.CostEstimate(
        flops=int(n_rows * n_cols),
        transcendentals=0,
        bytes_accessed=int(n_rows * n_cols * itemsize + n_rows * itemsize),
    )

    out_flat = pl.pallas_call(
        kernel,
        out_shape=out_shape,
        grid=grid,
        in_specs=[pl.BlockSpec((tile_rows, n_cols), lambda i: (i, 0))],
        out_specs=out_spec,
        compiler_params=pltpu.CompilerParams(
            dimension_semantics=("parallel",),
            vmem_limit_bytes=vmem_limit,
        ),
        cost_estimate=cost,
    )(x2)
    return out_flat.reshape(lead_shape)


def _reference(x, n_dims, reduction):
    for _ in range(n_dims):
        x = jnp.max(x, axis=-1) if reduction == "max" else jnp.mean(x, axis=-1)
    return x


if __name__ == "__main__":
    key = jax.random.PRNGKey(0)
    k1, k2, k3, k4 = jax.random.split(key, 4)

    ok = True

    # Small NCHW-style input consistent with the module's usage.
    x = jax.random.normal(k1, (2, 4, 16, 16), dtype=jnp.float32)
    for reduction in ("max", "mean"):
        out = jax.block_until_ready(feature_extractor(x, n_dims=2, reduction=reduction))
        ref = _reference(x, 2, reduction)
        ok &= out.shape == (2, 4)
        ok &= bool(jnp.allclose(out, ref, atol=1e-5, rtol=1e-5))

    # bf16 mean (f32 accumulation), n_dims=1, K=32 (not a multiple of 128).
    xb = jax.random.normal(k2, (2, 4, 16, 32), dtype=jnp.bfloat16)
    out_b = jax.block_until_ready(feature_extractor(xb, n_dims=1, reduction="mean"))
    ref_b = _reference(xb, 1, "mean")
    ok &= out_b.shape == (2, 4, 16)
    ok &= bool(
        jnp.allclose(
            out_b.astype(jnp.float32), ref_b.astype(jnp.float32), atol=2e-2, rtol=2e-2
        )
    )

    # All-negative max with K=96 (not a multiple of 128): checks that padded
    # lanes use the reduction's neutral element (-inf), not zeros.
    xn = -jnp.abs(jax.random.normal(k3, (2, 4, 12, 8), dtype=jnp.float32)) - 1.0
    out_n = jax.block_until_ready(feature_extractor(xn, n_dims=2, reduction="max"))
    ref_n = _reference(xn, 2, "max")
    ok &= bool(jnp.allclose(out_n, ref_n, atol=1e-5, rtol=1e-5))
    ok &= bool(jnp.all(out_n < 0))

    # Multi-tile grid path: n_rows = 512 >= 256 triggers the 2-step megacore split.
    xl = jax.random.normal(k4, (4, 128, 8, 64), dtype=jnp.float32)
    out_l = jax.block_until_ready(feature_extractor(xl, n_dims=2, reduction="mean"))
    ref_l = _reference(xl, 2, "mean")
    ok &= out_l.shape == (4, 128)
    ok &= bool(jnp.allclose(out_l, ref_l, atol=1e-5, rtol=1e-5))

    if ok:
        print("KERNEL_OK")
</pallas_src>

<mosaic_0001>
module attributes {stable_mosaic.version = 11 : i64} {
  func.func @_reduce_rows_kernel(%arg0: i32, %arg1: memref<8x256xf32, #tpu.memory_space<vmem>>, %arg2: memref<1x8xf32, #tpu.memory_space<vmem>>) attributes {dimension_semantics = [#tpu.dimension_semantics<parallel>], iteration_bounds = array<i64: 1>, scalar_prefetch = 0 : i64, scratch_operands = 0 : i64, tpu.core_type = #tpu.core_type<tc>, window_params = [{transform_indices = @transform_0, window_bounds = array<i64: 8, 256>}, {transform_indices = @transform_1, window_bounds = array<i64: 1, 8>}]} {
    %c0 = arith.constant 0 : index
    %c0_0 = arith.constant 0 : index
    %0 = vector.load %arg1[%c0, %c0_0] : memref<8x256xf32, #tpu.memory_space<vmem>>, vector<8x256xf32>
    %cst = arith.constant dense<0xFF800000> : vector<8xf32>
    %1 = vector.multi_reduction <maximumf>, %0, %cst [1] : vector<8x256xf32> to vector<8xf32>
    %2 = vector.shape_cast %1 : vector<8xf32> to vector<1x8xf32>
    %c0_1 = arith.constant 0 : index
    %c0_2 = arith.constant 0 : index
    %3 = vector.load %arg2[%c0_1, %c0_2] : memref<1x8xf32, #tpu.memory_space<vmem>>, vector<1x8xf32>
    tpu.vector_store %arg2[%c0_1, %c0_2], %2 {strides = array<i32>} : memref<1x8xf32, #tpu.memory_space<vmem>>, vector<1x8xf32>,
    return
  }
  func.func @transform_0(%arg0: i32) -> (i32, i32) {
    %c0_i32 = arith.constant 0 : i32
    %c0_i32_0 = arith.constant 0 : i32
    return %arg0, %c0_i32 : i32, i32
  }
  func.func @transform_1(%arg0: i32) -> (i32, i32) {
    %c0_i32 = arith.constant 0 : i32
    %c0_i32_0 = arith.constant 0 : i32
    return %c0_i32, %arg0 : i32, i32
  }
}

</mosaic_0001>

<llo_original>
// kernel: tpu_custom_call.1
$region0: #{tpu_custom_call.1}
  #allocation0 [shape = 'u32[]', space=smem, size = 0x4, offset = 0x4, fixed_abs, tag = 'smem constant byte address 0x4 - core index']
  #allocation1 [shape = 'u32[144,128]{1,0:T(1,128)}', space=vmem, size = 0x12000, scoped, tag = 'internal scratch']
  %s0 = inlined_call_operand.hbm [shape: f32[8,256], index: 0, kind: input, shape index: {}]
  %s1 = inlined_call_operand.hbm [shape: f32[1,8], index: 1, kind: output, shape index: {}]
  %s2 = sld [smem:[#allocation0]]
  $region18: #{tpu_custom_call.1} parent=0
    _
  %s4 = ssub.s32 1, %s2
  %s5 = scalar_select 0, %s4, %s2
  $region1: #{tpu_custom_call.1} parent=0
    #allocation2 [shape = 'u8[8192]{0}', space=vmem, size = 0x2000, scoped, tag = 'input window, operand 0, single buffered']
    #allocation3 [shape = 's32[1]{0}', space=sflag, size = 0x4, scoped, tag = 'scoped memory for tpu_custom_call.1']
    #allocation4 [shape = 's32[1]{0}', space=sflag, size = 0x4, scoped, tag = 'scoped memory for tpu_custom_call.1']
    #allocation5 [shape = 'u8[512]{0}', space=vmem, size = 0x400, scoped, tag = 'output window, operand 0, single buffered']
    %6 = vsyncpa [#allocation3], 0
    %7 = vsyncpa [#allocation4], 0
    // Predicated region
    $region2: #{tpu_custom_call.1} parent=1 // pred_check
      _
    $region3: #{tpu_custom_call.1} parent=1 // pred_check_branch
      %9 = sbr.rel (0) target = $region5
    $region4: #{tpu_custom_call.1} parent=1 // pred_region
      %s11 = ssub.s32 256, 256
      %12 = vsyncadd [#allocation3], %s11
      %s14 = sshll.u32 [#allocation2], 4
      %s15 = int_to_ptr.vmem [resolvable:$true] %s14
      %17 = dma.hbm_to_vmem [thread:$0]  %s0, 256, %s15, [#allocation3]
    $region5: #{tpu_custom_call.1} parent=1 // pred_fallthru
      _
    // Predicated region
    $region6: #{tpu_custom_call.1} parent=1 // pred_check
      _
    $region7: #{tpu_custom_call.1} parent=1 // pred_check_branch
      %19 = sbr.rel (0) target = $region9
    $region8: #{tpu_custom_call.1} parent=1 // pred_region
      %20 = dma.done [#allocation3], 256
    $region9: #{tpu_custom_call.1} parent=1 // pred_fallthru
      _
    %v21 = vld [vmem:[#allocation2] sm:$0xff]
    %v22 = vld [vmem:[#allocation2 + $0x8] sm:$0xff]
    %v23 = vmax.f32 %v21, %v22
    %24 = vmax.xlane.f32.xlu0 %v23
    %v25 = vpop.xlane.xlu0 %24
    %v27 = vlaneseq
    %v28 = vand.u32 %v27, 127
    %v29 = vlaneseq
    %v30 = vshrl.u32 %v29, 7
    %v31 = vsub.s32 %v28, %v30
    %v32 = vrot.slane %v25, %v31
    %vm34 = vcmask 57344
    %35 = vst.msk [vmem:[#allocation5] sm:$0x1] %vm34, %v32
    // Predicated region
    $region10: #{tpu_custom_call.1} parent=1 // pred_check
      _
    $region11: #{tpu_custom_call.1} parent=1 // pred_check_branch
      %37 = sbr.rel (0) target = $region13
    $region12: #{tpu_custom_call.1} parent=1 // pred_region
      %s39 = ssub.s32 16, 16
      %40 = vsyncadd [#allocation4], %s39
      %s42 = sshll.u32 [#allocation5], 4
      %s43 = int_to_ptr.vmem [resolvable:$true] %s42
      %45 = dma.vmem_to_hbm [thread:$0]  %s43, 16, %s1, [#allocation4]
    $region13: #{tpu_custom_call.1} parent=1 // pred_fallthru
      _
    // Predicated region
    $region14: #{tpu_custom_call.1} parent=1 // pred_check
      _
    $region15: #{tpu_custom_call.1} parent=1 // pred_check_branch
      %47 = sbr.rel (0) target = $region17
    $region16: #{tpu_custom_call.1} parent=1 // pred_region
      %48 = dma.done [#allocation4], 16
    $region17: #{tpu_custom_call.1} parent=1 // pred_fallthru
      _
    %49 = vsyncpa [#allocation3], 1
    %50 = vsyncpa [#allocation4], 1

</llo_original>
